<compile_context>
chip_gen: v7x
topology: tpu7x:2x2x1
jax: 0.10.0
libtpu: 0.0.40
codegen_flags: <defaults>
</compile_context>

<pallas_src>
import functools

import jax
import jax.numpy as jnp
from jax.experimental import pallas as pl
from jax.experimental.pallas import tpu as pltpu


def _elbo_kernel(x_ref, emu_ref, elv_ref, dmu_ref, dlv_ref, out_ref, *, inv_k):
    """One grid step = one tile of Bt batch elements.

    x_ref   : (Bt, 1, M)
    emu_ref : (Bt, 1, D)
    elv_ref : (Bt, 1, D)
    dmu_ref : (Bt, K, M)
    dlv_ref : (Bt, K, M)
    out_ref : (1, 8, 128) -- scalar partial for this tile (sum over its Bt rows)
    """
    # KL term, un-scaled: sum_{b,d} (mu^2 + exp(lv) - lv - 1)
    emu = emu_ref[...].astype(jnp.float32)
    elv = elv_ref[...].astype(jnp.float32)
    kl_raw = jnp.sum(emu * emu + jnp.exp(elv) - elv - 1.0)

    # Reconstruction term, un-scaled: sum_{b,k,m} (diff^2 * exp(-lv) + lv)
    # (x - mu)^2 / (2 exp(lv)) + 0.5 lv == 0.5 * (diff^2 * exp(-lv) + lv);
    # the 0.5 is hoisted out of the elementwise expression below.
    x = x_ref[...].astype(jnp.float32)          # (Bt, 1, M) broadcasts over K
    dmu = dmu_ref[...].astype(jnp.float32)      # (Bt, K, M)
    dlv = dlv_ref[...].astype(jnp.float32)      # (Bt, K, M)
    diff = x - dmu
    recon_raw = jnp.sum(diff * diff * jnp.exp(-dlv) + dlv)

    # Per-batch contribution: 0.5 * kl_raw_b + 0.5 * (1/K) * recon_raw_b,
    # summed over the Bt rows of this tile.  Scalar scales applied once.
    partial = 0.5 * (kl_raw + inv_k * recon_raw)

    out_ref[...] = jnp.full(out_ref.shape, partial, dtype=jnp.float32)


def _pick_bt(B, K, M, itemsize, budget_bytes):
    """Largest divisor of B whose double-buffered decoder blocks fit budget."""
    per_b = 4 * K * M * itemsize             # 2 decoder tensors x 2 pipeline buffers
    bt_max = max(1, budget_bytes // per_b)
    # When the decoder slabs are big enough for per-step overhead to be
    # amortized anyway, keep the grid length >= 2 (v7x megacore + pipelining).
    if B > 1 and 2 * B * K * M * itemsize > (4 << 20):
        bt_max = min(bt_max, max(1, B // 2))
    bt = 1
    for d in range(1, B + 1):
        if B % d == 0 and d <= bt_max:
            bt = d
    return bt


def elbo_loss_pallas(x, enc_mu, enc_logvar, dec_mu, dec_logvar):
    """Negative ELBO, identical semantics to the PyTorch ELBOLoss.forward."""
    B, M = x.shape
    D = enc_mu.shape[1]
    K = dec_mu.shape[1]

    # Free, contiguous reshapes so every BlockSpec's last two dims equal the
    # full array dims (satisfies the (8, 128) constraint without touching the
    # big decoder tensors, which stay in their native (B, K, M) layout).
    x3 = x.reshape(B, 1, M)
    emu3 = enc_mu.reshape(B, 1, D)
    elv3 = enc_logvar.reshape(B, 1, D)

    dec_itemsize = dec_mu.dtype.itemsize
    # ~40 MiB budget for the double-buffered decoder blocks: leaves headroom
    # within v7x's 64 MiB physical VMEM per TC and is comfortable on v5e/v6e.
    bt = _pick_bt(B, K, M, dec_itemsize, budget_bytes=40 << 20)
    grid_b = B // bt

    # Explicit scoped-VMEM limit so batch-tiled blocks are not rejected by the
    # default scoped limit (16 MiB on v5e, 32 MiB on v6e/v7x).
    vmem_need = (
        2 * 2 * bt * K * M * dec_itemsize          # dec_mu + dec_logvar, 2 bufs
        + 2 * bt * M * x.dtype.itemsize            # x, 2 bufs
        + 2 * 2 * bt * D * enc_mu.dtype.itemsize   # enc_mu + enc_logvar, 2 bufs
        + 2 * 8 * 128 * 4                          # output block, 2 bufs
    )
    vmem_limit = int(min(60 << 20, max(32 << 20, (vmem_need * 3) // 2)))

    kernel = functools.partial(_elbo_kernel, inv_k=1.0 / K)

    partials = pl.pallas_call(
        kernel,
        out_shape=jax.ShapeDtypeStruct((grid_b, 8, 128), jnp.float32),
        grid_spec=pltpu.PrefetchScalarGridSpec(
            num_scalar_prefetch=0,
            grid=(grid_b,),
            in_specs=[
                pl.BlockSpec((bt, 1, M), lambda g: (g, 0, 0)),   # x
                pl.BlockSpec((bt, 1, D), lambda g: (g, 0, 0)),   # enc_mu
                pl.BlockSpec((bt, 1, D), lambda g: (g, 0, 0)),   # enc_logvar
                pl.BlockSpec((bt, K, M), lambda g: (g, 0, 0)),   # dec_mu (native layout)
                pl.BlockSpec((bt, K, M), lambda g: (g, 0, 0)),   # dec_logvar
            ],
            out_specs=pl.BlockSpec((1, 8, 128), lambda g: (g, 0, 0)),
        ),
        compiler_params=pltpu.CompilerParams(
            dimension_semantics=("parallel",),      # batch tiles are independent
            vmem_limit_bytes=vmem_limit),
    )(x3, emu3, elv3, dec_mu, dec_logvar)

    # Tiny final reduction over the (B / Bt) per-tile partials in plain JAX.
    return jnp.sum(partials[:, 0, 0]) / B


def elbo_loss_ref(x, enc_mu, enc_logvar, dec_mu, dec_logvar):
    """Pure-JAX reference mirroring the PyTorch forward exactly."""
    xk = jnp.broadcast_to(x[:, None, :], dec_mu.shape)
    kl = 0.5 * jnp.sum(enc_mu ** 2 + jnp.exp(enc_logvar) - enc_logvar - 1.0, axis=1)
    recon = jnp.mean(
        jnp.sum((xk - dec_mu) ** 2 / (2.0 * jnp.exp(dec_logvar))
                + 0.5 * dec_logvar, axis=2),
        axis=1)
    return jnp.mean(kl + recon, axis=0)


if __name__ == "__main__":
    # Small shapes consistent with the module: x is a flattened NCHW image.
    B, C, H, W = 2, 4, 16, 16
    M = C * H * W        # 1024
    D = 32               # latent dim
    K = 8                # number of z samples

    key = jax.random.PRNGKey(0)
    k1, k2, k3, k4, k5 = jax.random.split(key, 5)
    x = jax.random.normal(k1, (B, C, H, W), jnp.float32).reshape(B, M)
    enc_mu = jax.random.normal(k2, (B, D), jnp.float32)
    enc_logvar = 0.1 * jax.random.normal(k3, (B, D), jnp.float32)
    dec_mu = jax.random.normal(k4, (B, K, M), jnp.float32)
    dec_logvar = 0.1 * jax.random.normal(k5, (B, K, M), jnp.float32)

    loss = elbo_loss_pallas(x, enc_mu, enc_logvar, dec_mu, dec_logvar)
    loss = jax.block_until_ready(loss)

    ref = elbo_loss_ref(x, enc_mu, enc_logvar, dec_mu, dec_logvar)
    assert jnp.allclose(loss, ref, rtol=1e-4, atol=1e-4), (loss, ref)

    print("KERNEL_OK")
</pallas_src>

<mosaic_0001>
module attributes {stable_mosaic.version = 11 : i64} {
  func.func @_elbo_kernel(%arg0: i32, %arg1: memref<2x1x1024xf32, #tpu.memory_space<vmem>>, %arg2: memref<2x1x32xf32, #tpu.memory_space<vmem>>, %arg3: memref<2x1x32xf32, #tpu.memory_space<vmem>>, %arg4: memref<2x8x1024xf32, #tpu.memory_space<vmem>>, %arg5: memref<2x8x1024xf32, #tpu.memory_space<vmem>>, %arg6: memref<1x8x128xf32, #tpu.memory_space<vmem>>) attributes {dimension_semantics = [#tpu.dimension_semantics<parallel>], iteration_bounds = array<i64: 1>, scalar_prefetch = 0 : i64, scratch_operands = 0 : i64, tpu.core_type = #tpu.core_type<tc>, window_params = [{transform_indices = @transform_0, window_bounds = array<i64: 2, 1, 1024>}, {transform_indices = @transform_1, window_bounds = array<i64: 2, 1, 32>}, {transform_indices = @transform_2, window_bounds = array<i64: 2, 1, 32>}, {transform_indices = @transform_3, window_bounds = array<i64: 2, 8, 1024>}, {transform_indices = @transform_4, window_bounds = array<i64: 2, 8, 1024>}, {transform_indices = @transform_5, window_bounds = array<i64: 1, 8, 128>}]} {
    %c0 = arith.constant 0 : index
    %c0_0 = arith.constant 0 : index
    %c0_1 = arith.constant 0 : index
    %0 = vector.load %arg2[%c0, %c0_0, %c0_1] : memref<2x1x32xf32, #tpu.memory_space<vmem>>, vector<2x1x32xf32>
    %c0_2 = arith.constant 0 : index
    %c0_3 = arith.constant 0 : index
    %c0_4 = arith.constant 0 : index
    %1 = vector.load %arg3[%c0_2, %c0_3, %c0_4] : memref<2x1x32xf32, #tpu.memory_space<vmem>>, vector<2x1x32xf32>
    %2 = arith.mulf %0, %0 : vector<2x1x32xf32>
    %3 = math.exp %1 : vector<2x1x32xf32>
    %4 = arith.addf %2, %3 : vector<2x1x32xf32>
    %5 = arith.subf %4, %1 : vector<2x1x32xf32>
    %cst = arith.constant 1.000000e+00 : f32
    %6 = vector.broadcast %cst : f32 to vector<2x1x32xf32>
    %7 = arith.subf %5, %6 : vector<2x1x32xf32>
    %8 = vector.shape_cast %7 : vector<2x1x32xf32> to vector<1x2x1x32xf32>
    %cst_5 = arith.constant dense<0.000000e+00> : vector<1xf32>
    %9 = vector.multi_reduction <add>, %8, %cst_5 [1, 2, 3] : vector<1x2x1x32xf32> to vector<1xf32>
    %10 = vector.shape_cast %9 : vector<1xf32> to vector<1x1x1x1xf32>
    %11 = vector.extract %10[0, 0, 0, 0] : f32 from vector<1x1x1x1xf32>
    %c0_6 = arith.constant 0 : index
    %c0_7 = arith.constant 0 : index
    %c0_8 = arith.constant 0 : index
    %12 = vector.load %arg1[%c0_6, %c0_7, %c0_8] : memref<2x1x1024xf32, #tpu.memory_space<vmem>>, vector<2x1x1024xf32>
    %c0_9 = arith.constant 0 : index
    %c0_10 = arith.constant 0 : index
    %c0_11 = arith.constant 0 : index
    %13 = vector.load %arg4[%c0_9, %c0_10, %c0_11] : memref<2x8x1024xf32, #tpu.memory_space<vmem>>, vector<2x8x1024xf32>
    %c0_12 = arith.constant 0 : index
    %c0_13 = arith.constant 0 : index
    %c0_14 = arith.constant 0 : index
    %14 = vector.load %arg5[%c0_12, %c0_13, %c0_14] : memref<2x8x1024xf32, #tpu.memory_space<vmem>>, vector<2x8x1024xf32>
    %15 = vector.broadcast %12 : vector<2x1x1024xf32> to vector<2x8x1024xf32>
    %16 = arith.subf %15, %13 : vector<2x8x1024xf32>
    %17 = arith.mulf %16, %16 : vector<2x8x1024xf32>
    %cst_15 = arith.constant 0.000000e+00 : f32
    %18 = vector.broadcast %cst_15 : f32 to vector<2x8x1024xf32>
    %19 = arith.subf %18, %14 : vector<2x8x1024xf32>
    %20 = math.exp %19 : vector<2x8x1024xf32>
    %21 = arith.mulf %17, %20 : vector<2x8x1024xf32>
    %22 = arith.addf %21, %14 : vector<2x8x1024xf32>
    %23 = vector.shape_cast %22 : vector<2x8x1024xf32> to vector<1x2x8x1024xf32>
    %cst_16 = arith.constant dense<0.000000e+00> : vector<1xf32>
    %24 = vector.multi_reduction <add>, %23, %cst_16 [1, 2, 3] : vector<1x2x8x1024xf32> to vector<1xf32>
    %25 = vector.shape_cast %24 : vector<1xf32> to vector<1x1x1x1xf32>
    %26 = vector.extract %25[0, 0, 0, 0] : f32 from vector<1x1x1x1xf32>
    %cst_17 = arith.constant 1.250000e-01 : f32
    %27 = arith.mulf %cst_17, %26 : f32
    %28 = arith.addf %11, %27 : f32
    %cst_18 = arith.constant 5.000000e-01 : f32
    %29 = arith.mulf %cst_18, %28 : f32
    %30 = vector.broadcast %29 : f32 to vector<1x8x128xf32>
    %c0_19 = arith.constant 0 : index
    %c0_20 = arith.constant 0 : index
    %c0_21 = arith.constant 0 : index
    %31 = vector.load %arg6[%c0_19, %c0_20, %c0_21] : memref<1x8x128xf32, #tpu.memory_space<vmem>>, vector<1x8x128xf32>
    tpu.vector_store %arg6[%c0_19, %c0_20, %c0_21], %30 {strides = array<i32>} : memref<1x8x128xf32, #tpu.memory_space<vmem>>, vector<1x8x128xf32>,
    return
  }
  func.func @transform_0(%arg0: i32) -> (i32, i32, i32) {
    %c0_i32 = arith.constant 0 : i32
    %c0_i32_0 = arith.constant 0 : i32
    %c0_i32_1 = arith.constant 0 : i32
    return %arg0, %c0_i32, %c0_i32_0 : i32, i32, i32
  }
  func.func @transform_1(%arg0: i32) -> (i32, i32, i32) {
    %c0_i32 = arith.constant 0 : i32
    %c0_i32_0 = arith.constant 0 : i32
    %c0_i32_1 = arith.constant 0 : i32
    return %arg0, %c0_i32, %c0_i32_0 : i32, i32, i32
  }
  func.func @transform_2(%arg0: i32) -> (i32, i32, i32) {
    %c0_i32 = arith.constant 0 : i32
    %c0_i32_0 = arith.constant 0 : i32
    %c0_i32_1 = arith.constant 0 : i32
    return %arg0, %c0_i32, %c0_i32_0 : i32, i32, i32
  }
  func.func @transform_3(%arg0: i32) -> (i32, i32, i32) {
    %c0_i32 = arith.constant 0 : i32
    %c0_i32_0 = arith.constant 0 : i32
    %c0_i32_1 = arith.constant 0 : i32
    return %arg0, %c0_i32, %c0_i32_0 : i32, i32, i32
  }
  func.func @transform_4(%arg0: i32) -> (i32, i32, i32) {
    %c0_i32 = arith.constant 0 : i32
    %c0_i32_0 = arith.constant 0 : i32
    %c0_i32_1 = arith.constant 0 : i32
    return %arg0, %c0_i32, %c0_i32_0 : i32, i32, i32
  }
  func.func @transform_5(%arg0: i32) -> (i32, i32, i32) {
    %c0_i32 = arith.constant 0 : i32
    %c0_i32_0 = arith.constant 0 : i32
    %c0_i32_1 = arith.constant 0 : i32
    return %arg0, %c0_i32, %c0_i32_0 : i32, i32, i32
  }
}

</mosaic_0001>

<llo_original>
// kernel: tpu_custom_call.1
$region0: #{tpu_custom_call.1}
  #allocation0 [shape = 'u32[]', space=smem, size = 0x4, offset = 0x4, fixed_abs, tag = 'smem constant byte address 0x4 - core index']
  #allocation1 [shape = 'u32[144,128]{1,0:T(1,128)}', space=vmem, size = 0x12000, scoped, tag = 'internal scratch']
  %s0 = inlined_call_operand.hbm [shape: f32[2,1,1024], index: 0, kind: input, shape index: {}]
  %s1 = inlined_call_operand.vmem [shape: f32[2,1,32], index: 1, kind: input, shape index: {}]
  %s2 = inlined_call_operand.vmem [shape: f32[2,1,32], index: 2, kind: input, shape index: {}]
  %s3 = inlined_call_operand.hbm [shape: f32[2,8,1024], index: 3, kind: input, shape index: {}]
  %s4 = inlined_call_operand.hbm [shape: f32[2,8,1024], index: 4, kind: input, shape index: {}]
  %s5 = inlined_call_operand.hbm [shape: f32[1,8,128], index: 5, kind: output, shape index: {}]
  %s6 = sld [smem:[#allocation0]]
  $region42: #{tpu_custom_call.1} parent=0
    _
  %s8 = ssub.s32 1, %s6
  %s9 = scalar_select 0, %s8, %s6
  $region1: #{tpu_custom_call.1} parent=0
    #allocation2 [shape = 'u8[8192]{0}', space=vmem, size = 0x2000, scoped, tag = 'input window, operand 0, single buffered']
    #allocation3 [shape = 's32[1]{0}', space=sflag, size = 0x4, scoped, tag = 'scoped memory for tpu_custom_call.1']
    #allocation4 [shape = 's32[1]{0}', space=sflag, size = 0x4, scoped, tag = 'scoped memory for tpu_custom_call.1']
    #allocation5 [shape = 'u8[65536]{0}', space=vmem, size = 0x10000, scoped, tag = 'input window, operand 3, single buffered']
    #allocation6 [shape = 's32[1]{0}', space=sflag, size = 0x4, scoped, tag = 'scoped memory for tpu_custom_call.1']
    #allocation7 [shape = 'u8[65536]{0}', space=vmem, size = 0x10000, scoped, tag = 'input window, operand 4, single buffered']
    #allocation8 [shape = 'u8[4096]{0}', space=vmem, size = 0x1000, scoped, tag = 'output window, operand 0, single buffered']
    %10 = vsyncpa [#allocation3], 0
    %11 = vsyncpa [#allocation6], 0
    %12 = vsyncpa [#allocation4], 0
    // Predicated region
    $region2: #{tpu_custom_call.1} parent=1 // pred_check
      _
    $region3: #{tpu_custom_call.1} parent=1 // pred_check_branch
      %14 = sbr.rel (0) target = $region5
    $region4: #{tpu_custom_call.1} parent=1 // pred_region
      %s16 = ssub.s32 256, 256
      %17 = vsyncadd [#allocation3], %s16
      %s18 = sshll.u32 [#allocation2], 4
      %s19 = int_to_ptr.vmem [resolvable:$true] %s18
      %24 = dma.hbm_to_vmem [thread:$0]  %s0, 256, %s19, [#allocation3], 128, 128, 8
    $region5: #{tpu_custom_call.1} parent=1 // pred_fallthru
      _
    // Predicated region
    $region6: #{tpu_custom_call.1} parent=1 // pred_check
      _
    $region7: #{tpu_custom_call.1} parent=1 // pred_check_branch
      %26 = sbr.rel (0) target = $region9
    $region8: #{tpu_custom_call.1} parent=1 // pred_region
      _
    $region9: #{tpu_custom_call.1} parent=1 // pred_fallthru
      _
    // Predicated region
    $region10: #{tpu_custom_call.1} parent=1 // pred_check
      _
    $region11: #{tpu_custom_call.1} parent=1 // pred_check_branch
      %28 = sbr.rel (0) target = $region13
    $region12: #{tpu_custom_call.1} parent=1 // pred_region
      _
    $region13: #{tpu_custom_call.1} parent=1 // pred_fallthru
      _
    // Predicated region
    $region14: #{tpu_custom_call.1} parent=1 // pred_check
      _
    $region15: #{tpu_custom_call.1} parent=1 // pred_check_branch
      %30 = sbr.rel (0) target = $region17
    $region16: #{tpu_custom_call.1} parent=1 // pred_region
      %s32 = ssub.s32 2048, 2048
      %33 = vsyncadd [#allocation6], %s32
      %s34 = sshll.u32 [#allocation5], 4
      %s35 = int_to_ptr.vmem [resolvable:$true] %s34
      %40 = dma.hbm_to_vmem [thread:$0]  %s3, 2048, %s35, [#allocation6], 1024, 1024, 64
    $region17: #{tpu_custom_call.1} parent=1 // pred_fallthru
      _
    // Predicated region
    $region18: #{tpu_custom_call.1} parent=1 // pred_check
      _
    $region19: #{tpu_custom_call.1} parent=1 // pred_check_branch
      %42 = sbr.rel (0) target = $region21
    $region20: #{tpu_custom_call.1} parent=1 // pred_region
      %s44 = ssub.s32 2048, 2048
      %45 = vsyncadd [#allocation6], %s44
      %s46 = sshll.u32 [#allocation7], 4
      %s47 = int_to_ptr.vmem [resolvable:$true] %s46
      %52 = dma.hbm_to_vmem [thread:$0]  %s4, 2048, %s47, [#allocation6], 1024, 1024, 64
    $region21: #{tpu_custom_call.1} parent=1 // pred_fallthru
      _
    // Predicated region
    $region22: #{tpu_custom_call.1} parent=1 // pred_check
      _
    $region23: #{tpu_custom_call.1} parent=1 // pred_check_branch
      %54 = sbr.rel (0) target = $region25
    $region24: #{tpu_custom_call.1} parent=1 // pred_region
      %55 = dma.done [#allocation3], 256
    $region25: #{tpu_custom_call.1} parent=1 // pred_fallthru
      _
    // Predicated region
    $region26: #{tpu_custom_call.1} parent=1 // pred_check
      _
    $region27: #{tpu_custom_call.1} parent=1 // pred_check_branch
      %57 = sbr.rel (0) target = $region29
    $region28: #{tpu_custom_call.1} parent=1 // pred_region
      %58 = dma.done [#allocation6], 2048
    $region29: #{tpu_custom_call.1} parent=1 // pred_fallthru
      _
    // Predicated region
    $region30: #{tpu_custom_call.1} parent=1 // pred_check
      _
    $region31: #{tpu_custom_call.1} parent=1 // pred_check_branch
      %60 = sbr.rel (0) target = $region33
    $region32: #{tpu_custom_call.1} parent=1 // pred_region
      %61 = dma.done [#allocation6], 2048
    $region33: #{tpu_custom_call.1} parent=1 // pred_fallthru
      _
    %v62 = vld [vmem:[%s1] sm:$0x1]
    %v63 = vld [vmem:[%s1 + $0x1] sm:$0x1]
    %v64 = vld [vmem:[%s2] sm:$0x1]
    %v65 = vld [vmem:[%s2 + $0x1] sm:$0x1]
    %v66 = vmul.f32 %v62, %v62
    %v67 = vmul.f32 %v63, %v63
    %v68 = vmul.f32 %v64, 1.442695
    %v69 = vpow.pop %v68
    %v70 = vmul.f32 %v65, 1.442695
    %v71 = vpow.pop %v70
    %v72 = vadd.f32 %v66, %v69
    %v73 = vadd.f32 %v67, %v71
    %v74 = vsub.f32 %v72, %v64
    %v75 = vsub.f32 %v73, %v65
    %v76 = vsub.f32 %v74, 1.0
    %v77 = vsub.f32 %v75, 1.0
    %vm78 = vcmask 253952
    %v79 = vsel %vm78, %v76, 0.0
    %v80 = vsel %vm78, %v77, 0.0
    %v81 = vadd.f32 %v79, %v80
    %82 = vadd.xlane.f32.xlu0 %v81
    %v83 = vpop.xlane.xlu0 %82
    %v84 = vrot.slane %v83, 4
    %v85 = vadd.f32 %v83, %v84
    %v86 = vrot.slane %v85, 2
    %v87 = vadd.f32 %v85, %v86
    %v88 = vrot.slane %v87, 1
    %v89 = vadd.f32 %v87, %v88
    %s90 = vtos %v89
    %v91 = vld [vmem:[#allocation2] sm:$0xff]
    %v92 = vld [vmem:[#allocation2 + $0x8] sm:$0xff]
    %v93 = vld [vmem:[#allocation5] sm:$0xff]
    %v94 = vld [vmem:[#allocation5 + $0x8] sm:$0xff]
    %v95 = vld [vmem:[#allocation5 + $0x10] sm:$0xff]
    %v96 = vld [vmem:[#allocation5 + $0x18] sm:$0xff]
    %v97 = vld [vmem:[#allocation5 + $0x20] sm:$0xff]
    %v98 = vld [vmem:[#allocation5 + $0x28] sm:$0xff]
    %v99 = vld [vmem:[#allocation5 + $0x30] sm:$0xff]
    %v100 = vld [vmem:[#allocation5 + $0x38] sm:$0xff]
    %v101 = vld [vmem:[#allocation5 + $0x40] sm:$0xff]
    %v102 = vld [vmem:[#allocation5 + $0x48] sm:$0xff]
    %v103 = vld [vmem:[#allocation5 + $0x50] sm:$0xff]
    %v104 = vld [vmem:[#allocation5 + $0x58] sm:$0xff]
    %v105 = vld [vmem:[#allocation5 + $0x60] sm:$0xff]
    %v106 = vld [vmem:[#allocation5 + $0x68] sm:$0xff]
    %v107 = vld [vmem:[#allocation5 + $0x70] sm:$0xff]
    %v108 = vld [vmem:[#allocation5 + $0x78] sm:$0xff]
    %v109 = vld [vmem:[#allocation7] sm:$0xff]
    %v110 = vld [vmem:[#allocation7 + $0x8] sm:$0xff]
    %v111 = vld [vmem:[#allocation7 + $0x10] sm:$0xff]
    %v112 = vld [vmem:[#allocation7 + $0x18] sm:$0xff]
    %v113 = vld [vmem:[#allocation7 + $0x20] sm:$0xff]
    %v114 = vld [vmem:[#allocation7 + $0x28] sm:$0xff]
    %v115 = vld [vmem:[#allocation7 + $0x30] sm:$0xff]
    %v116 = vld [vmem:[#allocation7 + $0x38] sm:$0xff]
    %v117 = vld [vmem:[#allocation7 + $0x40] sm:$0xff]
    %v118 = vld [vmem:[#allocation7 + $0x48] sm:$0xff]
    %v119 = vld [vmem:[#allocation7 + $0x50] sm:$0xff]
    %v120 = vld [vmem:[#allocation7 + $0x58] sm:$0xff]
    %v121 = vld [vmem:[#allocation7 + $0x60] sm:$0xff]
    %v122 = vld [vmem:[#allocation7 + $0x68] sm:$0xff]
    %v123 = vld [vmem:[#allocation7 + $0x70] sm:$0xff]
    %v124 = vld [vmem:[#allocation7 + $0x78] sm:$0xff]
    %v127 = vlaneseq
    %v128 = vshrl.u32 %v127, 7
    %v129 = vsub.s32 0, %v128
    %v130 = vrot.slane %v91, %v129
    %v131 = vlaneseq
    %v132 = vshrl.u32 %v131, 7
    %v133 = vsub.s32 1, %v132
    %v134 = vrot.slane %v91, %v133
    %v135 = vlaneseq
    %v136 = vshrl.u32 %v135, 7
    %v137 = vsub.s32 2, %v136
    %v138 = vrot.slane %v91, %v137
    %v139 = vlaneseq
    %v140 = vshrl.u32 %v139, 7
    %v141 = vsub.s32 3, %v140
    %v142 = vrot.slane %v91, %v141
    %v143 = vlaneseq
    %v144 = vshrl.u32 %v143, 7
    %v145 = vsub.s32 4, %v144
    %v146 = vrot.slane %v91, %v145
    %v147 = vlaneseq
    %v148 = vshrl.u32 %v147, 7
    %v149 = vsub.s32 5, %v148
    %v150 = vrot.slane %v91, %v149
    %v151 = vlaneseq
    %v152 = vshrl.u32 %v151, 7
    %v153 = vsub.s32 6, %v152
    %v154 = vrot.slane %v91, %v153
    %v155 = vlaneseq
    %v156 = vshrl.u32 %v155, 7
    %v157 = vsub.s32 7, %v156
    %v158 = vrot.slane %v91, %v157
    %v159 = vlaneseq
    %v160 = vshrl.u32 %v159, 7
    %v161 = vsub.s32 0, %v160
    %v162 = vrot.slane %v92, %v161
    %v163 = vlaneseq
    %v164 = vshrl.u32 %v163, 7
    %v165 = vsub.s32 1, %v164
    %v166 = vrot.slane %v92, %v165
    %v167 = vlaneseq
    %v168 = vshrl.u32 %v167, 7
    %v169 = vsub.s32 2, %v168
    %v170 = vrot.slane %v92, %v169
    %v171 = vlaneseq
    %v172 = vshrl.u32 %v171, 7
    %v173 = vsub.s32 3, %v172
    %v174 = vrot.slane %v92, %v173
    %v175 = vlaneseq
    %v176 = vshrl.u32 %v175, 7
    %v177 = vsub.s32 4, %v176
    %v178 = vrot.slane %v92, %v177
    %v179 = vlaneseq
    %v180 = vshrl.u32 %v179, 7
    %v181 = vsub.s32 5, %v180
    %v182 = vrot.slane %v92, %v181
    %v183 = vlaneseq
    %v184 = vshrl.u32 %v183, 7
    %v185 = vsub.s32 6, %v184
    %v186 = vrot.slane %v92, %v185
    %v187 = vlaneseq
    %v188 = vshrl.u32 %v187, 7
    %v189 = vsub.s32 7, %v188
    %v190 = vrot.slane %v92, %v189
    %v207 = vsub.f32 %v130, %v93
    %v208 = vsub.f32 %v134, %v94
    %v209 = vsub.f32 %v138, %v95
    %v210 = vsub.f32 %v142, %v96
    %v211 = vsub.f32 %v146, %v97
    %v212 = vsub.f32 %v150, %v98
    %v213 = vsub.f32 %v154, %v99
    %v214 = vsub.f32 %v158, %v100
    %v215 = vsub.f32 %v162, %v101
    %v216 = vsub.f32 %v166, %v102
    %v217 = vsub.f32 %v170, %v103
    %v218 = vsub.f32 %v174, %v104
    %v219 = vsub.f32 %v178, %v105
    %v220 = vsub.f32 %v182, %v106
    %v221 = vsub.f32 %v186, %v107
    %v222 = vsub.f32 %v190, %v108
    %v223 = vmul.f32 %v207, %v207
    %v224 = vmul.f32 %v208, %v208
    %v225 = vmul.f32 %v209, %v209
    %v226 = vmul.f32 %v210, %v210
    %v227 = vmul.f32 %v211, %v211
    %v228 = vmul.f32 %v212, %v212
    %v229 = vmul.f32 %v213, %v213
    %v230 = vmul.f32 %v214, %v214
    %v231 = vmul.f32 %v215, %v215
    %v232 = vmul.f32 %v216, %v216
    %v233 = vmul.f32 %v217, %v217
    %v234 = vmul.f32 %v218, %v218
    %v235 = vmul.f32 %v219, %v219
    %v236 = vmul.f32 %v220, %v220
    %v237 = vmul.f32 %v221, %v221
    %v238 = vmul.f32 %v222, %v222
    %v239 = vsub.f32 0.0, %v109
    %v240 = vsub.f32 0.0, %v110
    %v241 = vsub.f32 0.0, %v111
    %v242 = vsub.f32 0.0, %v112
    %v243 = vsub.f32 0.0, %v113
    %v244 = vsub.f32 0.0, %v114
    %v245 = vsub.f32 0.0, %v115
    %v246 = vsub.f32 0.0, %v116
    %v247 = vsub.f32 0.0, %v117
    %v248 = vsub.f32 0.0, %v118
    %v249 = vsub.f32 0.0, %v119
    %v250 = vsub.f32 0.0, %v120
    %v251 = vsub.f32 0.0, %v121
    %v252 = vsub.f32 0.0, %v122
    %v253 = vsub.f32 0.0, %v123
    %v254 = vsub.f32 0.0, %v124
    %v255 = vmul.f32 %v239, 1.442695
    %v256 = vpow.pop %v255
    %v257 = vmul.f32 %v240, 1.442695
    %v258 = vpow.pop %v257
    %v259 = vmul.f32 %v241, 1.442695
    %v260 = vpow.pop %v259
    %v261 = vmul.f32 %v242, 1.442695
    %v262 = vpow.pop %v261
    %v263 = vmul.f32 %v243, 1.442695
    %v264 = vpow.pop %v263
    %v265 = vmul.f32 %v244, 1.442695
    %v266 = vpow.pop %v265
    %v267 = vmul.f32 %v245, 1.442695
    %v268 = vpow.pop %v267
    %v269 = vmul.f32 %v246, 1.442695
    %v270 = vpow.pop %v269
    %v271 = vmul.f32 %v247, 1.442695
    %v272 = vpow.pop %v271
    %v273 = vmul.f32 %v248, 1.442695
    %v274 = vpow.pop %v273
    %v275 = vmul.f32 %v249, 1.442695
    %v276 = vpow.pop %v275
    %v277 = vmul.f32 %v250, 1.442695
    %v278 = vpow.pop %v277
    %v279 = vmul.f32 %v251, 1.442695
    %v280 = vpow.pop %v279
    %v281 = vmul.f32 %v252, 1.442695
    %v282 = vpow.pop %v281
    %v283 = vmul.f32 %v253, 1.442695
    %v284 = vpow.pop %v283
    %v285 = vmul.f32 %v254, 1.442695
    %v286 = vpow.pop %v285
    %v287 = vmul.f32 %v223, %v256
    %v288 = vmul.f32 %v224, %v258
    %v289 = vmul.f32 %v225, %v260
    %v290 = vmul.f32 %v226, %v262
    %v291 = vmul.f32 %v227, %v264
    %v292 = vmul.f32 %v228, %v266
    %v293 = vmul.f32 %v229, %v268
    %v294 = vmul.f32 %v230, %v270
    %v295 = vmul.f32 %v231, %v272
    %v296 = vmul.f32 %v232, %v274
    %v297 = vmul.f32 %v233, %v276
    %v298 = vmul.f32 %v234, %v278
    %v299 = vmul.f32 %v235, %v280
    %v300 = vmul.f32 %v236, %v282
    %v301 = vmul.f32 %v237, %v284
    %v302 = vmul.f32 %v238, %v286
    %v303 = vadd.f32 %v287, %v109
    %v304 = vadd.f32 %v288, %v110
    %v305 = vadd.f32 %v289, %v111
    %v306 = vadd.f32 %v290, %v112
    %v307 = vadd.f32 %v291, %v113
    %v308 = vadd.f32 %v292, %v114
    %v309 = vadd.f32 %v293, %v115
    %v310 = vadd.f32 %v294, %v116
    %v311 = vadd.f32 %v295, %v117
    %v312 = vadd.f32 %v296, %v118
    %v313 = vadd.f32 %v297, %v119
    %v314 = vadd.f32 %v298, %v120
    %v315 = vadd.f32 %v299, %v121
    %v316 = vadd.f32 %v300, %v122
    %v317 = vadd.f32 %v301, %v123
    %v318 = vadd.f32 %v302, %v124
    %v319 = vadd.f32 %v303, %v304
    %v320 = vadd.f32 %v319, %v305
    %v321 = vadd.f32 %v320, %v306
    %v322 = vadd.f32 %v321, %v307
    %v323 = vadd.f32 %v322, %v308
    %v324 = vadd.f32 %v323, %v309
    %v325 = vadd.f32 %v324, %v310
    %v326 = vadd.f32 %v325, %v311
    %v327 = vadd.f32 %v326, %v312
    %v328 = vadd.f32 %v327, %v313
    %v329 = vadd.f32 %v328, %v314
    %v330 = vadd.f32 %v329, %v315
    %v331 = vadd.f32 %v330, %v316
    %v332 = vadd.f32 %v331, %v317
    %v333 = vadd.f32 %v332, %v318
    %334 = vadd.xlane.f32.xlu0 %v333
    %v335 = vpop.xlane.xlu0 %334
    %v336 = vrot.slane %v335, 4
    %v337 = vadd.f32 %v335, %v336
    %v338 = vrot.slane %v337, 2
    %v339 = vadd.f32 %v337, %v338
    %v340 = vrot.slane %v339, 1
    %v341 = vadd.f32 %v339, %v340
    %s342 = vtos %v341
    %s343 = smul.f32 %s342, 0.125
    %s344 = sadd.f32 %s90, %s343
    %s345 = smul.f32 %s344, 0.5
    %v346 = vstv %s345
    %347 = vst [vmem:[#allocation8] sm:$0xff] %v346
    // Predicated region
    $region34: #{tpu_custom_call.1} parent=1 // pred_check
      _
    $region35: #{tpu_custom_call.1} parent=1 // pred_check_branch
      %349 = sbr.rel (0) target = $region37
    $region36: #{tpu_custom_call.1} parent=1 // pred_region
      %s351 = ssub.s32 128, 128
      %352 = vsyncadd [#allocation4], %s351
      %s354 = sshll.u32 [#allocation8], 4
      %s355 = int_to_ptr.vmem [resolvable:$true] %s354
      %357 = dma.vmem_to_hbm [thread:$0]  %s355, 128, %s5, [#allocation4]
    $region37: #{tpu_custom_call.1} parent=1 // pred_fallthru
      _
    // Predicated region
    $region38: #{tpu_custom_call.1} parent=1 // pred_check
      _
    $region39: #{tpu_custom_call.1} parent=1 // pred_check_branch
      %359 = sbr.rel (0) target = $region41
    $region40: #{tpu_custom_call.1} parent=1 // pred_region
      %360 = dma.done [#allocation4], 128
    $region41: #{tpu_custom_call.1} parent=1 // pred_fallthru
      _
    %361 = vsyncpa [#allocation3], 1
    %362 = vsyncpa [#allocation6], 1
    %363 = vsyncpa [#allocation4], 1

</llo_original>
